<compile_context>
chip_gen: v5e
topology: v5e:2x2
jax: 0.10.0
libtpu: 0.0.40
codegen_flags: <defaults>
</compile_context>

<pallas_src>
import functools

import jax
import jax.numpy as jnp
from jax.experimental import pallas as pl
from jax.experimental.pallas import tpu as pltpu

H = 64  # hidden width, fixed by the module


def _round_up(n: int, m: int) -> int:
    return ((n + m - 1) // m) * m


def _mlp_kernel(xt_ref, w1t_ref, b1_ref, w2t_ref, b2_ref, w3_ref, b3_ref, o_ref,
                *, sigma: bool, mxu_dtype):
    """Feature-major MLP tile.

    xt_ref : (d, bb) mxu_dtype   -- batch on lanes (fully lane-dense)
    w1t_ref: (H, d)  mxu_dtype   b1_ref: (H, 1) f32
    w2t_ref: (H, H)  mxu_dtype   b2_ref: (H, 1) f32
    w3_ref : (8, H)  mxu_dtype   (row 0 = head weights, rows 1-7 zero)   b3_ref: (1, 1) f32
    o_ref  : (1, bb) f32         -- naturally lane-dense, no relayout needed
    """
    xt = xt_ref[...]
    # Layer 1: (H, d) @ (d, bb) -> (H, bb); MXU output lanes fully used (N = bb).
    h1 = jnp.dot(w1t_ref[...], xt, preferred_element_type=jnp.float32)
    h1 = jnp.maximum(h1 + b1_ref[...], 0.0)                      # f32, lane-dense
    # Layer 2: (H, H) @ (H, bb) -> (H, bb).
    h2 = jnp.dot(w2t_ref[...], h1.astype(mxu_dtype),
                 preferred_element_type=jnp.float32)
    h2 = jnp.maximum(h2 + b2_ref[...], 0.0)
    # Head: small MXU matmul (8, H) @ (H, bb); keep row 0.  Replaces the old per-lane
    # XLU reduce + (bb,1)->(1,bb) relayout.
    out = jnp.dot(w3_ref[...], h2.astype(mxu_dtype),
                  preferred_element_type=jnp.float32)[0:1, :] + b3_ref[...]
    if sigma:
        out = jnp.maximum(out, 0.0) + 0.001
    o_ref[...] = out.astype(o_ref.dtype)


def _choose_block_b(B: int, d: int, block_b: int, mxu_itemsize: int) -> int:
    # (v7x) keep the 1-D "parallel" grid >= 2 steps when the batch allows it so both
    # TensorCores get work; bb stays a multiple of 128 (lane dim of the x/out tiles).
    bb = min(block_b, max(128, _round_up(-(-B // 2), 128)))

    # VMEM budget (target ~24 MiB of the 32 MiB scoped limit set below): double-buffered
    # x/out tiles + f32 h1/h2 activation scratch (+ mxu_dtype copies) + resident weights.
    def need(bb_):
        x_tiles = 2 * _round_up(d, 16) * bb_ * mxu_itemsize
        out_tiles = 2 * 8 * bb_ * 4
        acts = 2 * H * bb_ * (4 + mxu_itemsize)
        weights = 2 * 4 * 128 * (4 * H + 2 * 8)   # lane-padded, double-buffered, f32 bound
        return x_tiles + out_tiles + acts + weights

    while bb > 128 and need(bb) > (24 << 20):
        bb = max(128, _round_up(bb // 2, 128))
    return bb


def mlp_forward(x, params, *, sigma: bool = False, block_b: int = 2048,
                mxu_dtype=jnp.bfloat16):
    """x: (B, d) float32 -> (B, 1) float32 (matches the PyTorch MLP forward).

    mxu_dtype: dtype of the MXU operands (bf16 recommended on v6e/v7x); accumulation,
    biases, ReLU and the output stay float32.  Use jnp.float32 for bit-tight results.
    """
    w1, b1, w2, b2, w3, b3 = params
    B, d = x.shape
    assert block_b >= 128 and block_b % 128 == 0, "block_b must be a multiple of 128"

    mxu_itemsize = jnp.dtype(mxu_dtype).itemsize
    bb = _choose_block_b(B, d, block_b, mxu_itemsize)
    padded_B = _round_up(B, bb)
    grid = padded_B // bb

    if padded_B != B:
        x = jnp.pad(x, ((0, padded_B - B), (0, 0)))

    # Feature-major presentation: one fused transpose(+cast) pass over x in the wrapper;
    # the kernel then only issues canonical MXU matmuls on fully lane-dense activations.
    xt = x.T.astype(mxu_dtype)                                  # (d, padded_B)
    w1t = w1.T.astype(mxu_dtype)                                # (H, d)
    w2t = w2.T.astype(mxu_dtype)                                # (H, H)
    w3r = jnp.pad(w3.T.astype(mxu_dtype), ((0, 7), (0, 0)))    # (8, H), rows 1-7 zero
    b1c = b1.reshape(H, 1)
    b2c = b2.reshape(H, 1)
    b3c = b3.reshape(1, 1)

    # Full-array blocks with constant index_map: DMA'd into VMEM once, resident after.
    def full(a):
        return pl.BlockSpec(a.shape, lambda i: (0,) * a.ndim)

    flops = 2 * padded_B * (d * H + H * H + H)
    bytes_accessed = (int(xt.size) * mxu_itemsize + padded_B * 4 +
                      sum(int(a.size) * a.dtype.itemsize
                          for a in (w1t, b1c, w2t, b2c, w3r, b3c)))

    kernel = functools.partial(_mlp_kernel, sigma=sigma, mxu_dtype=mxu_dtype)
    out = pl.pallas_call(
        kernel,
        out_shape=jax.ShapeDtypeStruct((1, padded_B), jnp.float32),
        grid_spec=pltpu.PrefetchScalarGridSpec(
            num_scalar_prefetch=0,
            grid=(grid,),
            in_specs=[
                pl.BlockSpec((d, bb), lambda i: (0, i)),   # x tile: only pipelined input
                full(w1t), full(b1c),
                full(w2t), full(b2c),
                full(w3r), full(b3c),
            ],
            out_specs=pl.BlockSpec((1, bb), lambda i: (0, i)),  # lane-dense output row
        ),
        compiler_params=pltpu.CompilerParams(
            dimension_semantics=("parallel",),
            vmem_limit_bytes=32 * 1024 * 1024),
        cost_estimate=pl.CostEstimate(flops=flops, transcendentals=0,
                                      bytes_accessed=bytes_accessed),
    )(xt, w1t, b1c, w2t, b2c, w3r, b3c)

    # (1, padded_B) flattens in batch order; drop padding rows.
    return out.reshape(padded_B, 1)[:B]


def init_params(key, d):
    """Deterministic init mimicking PyTorch Linear default (uniform +/- 1/sqrt(fan_in))."""
    ks = jax.random.split(key, 6)

    def lin(kw, kb, fan_in, fan_out):
        bound = 1.0 / jnp.sqrt(jnp.float32(fan_in))
        w = jax.random.uniform(kw, (fan_in, fan_out), jnp.float32, -bound, bound)
        b = jax.random.uniform(kb, (1, fan_out), jnp.float32, -bound, bound)
        return w, b

    w1, b1 = lin(ks[0], ks[1], d, H)
    w2, b2 = lin(ks[2], ks[3], H, H)
    w3, b3 = lin(ks[4], ks[5], H, 1)
    return (w1, b1, w2, b2, w3, b3)


def mlp_reference(x, params, *, sigma: bool = False, mxu_dtype=jnp.float32):
    """Pure-JAX reference. mxu_dtype quantises matmul operands the same way the kernel does."""
    w1, b1, w2, b2, w3, b3 = params
    q = lambda a: a.astype(mxu_dtype).astype(jnp.float32)
    h1 = jnp.maximum(q(x) @ q(w1) + b1, 0.0)
    h2 = jnp.maximum(q(h1) @ q(w2) + b2, 0.0)
    out = q(h2) @ q(w3) + b3
    if sigma:
        out = jnp.maximum(out, 0.0)
    perturb = 0.001 if sigma else 0.0
    return out + perturb


if __name__ == "__main__":
    key = jax.random.PRNGKey(0)
    kx, kp = jax.random.split(key)

    d = 16
    params = init_params(kp, d)

    # --- f32-MXU path: B=1024 -> bb=512, grid of 2 "parallel" steps --------------------
    B = 1024
    x = jax.random.normal(kx, (B, d), jnp.float32)
    out = mlp_forward(x, params, sigma=False, mxu_dtype=jnp.float32)
    out = jax.block_until_ready(out)
    ref = mlp_reference(x, params, sigma=False)
    assert out.shape == (B, 1)
    assert jnp.allclose(out, ref, atol=5e-4, rtol=5e-4)

    # --- bf16-MXU path (v6e/v7x recommendation): checked against a reference that
    #     quantises the matmul operands identically (accumulation stays f32) -------------
    out_bf = mlp_forward(x, params, sigma=False, mxu_dtype=jnp.bfloat16)
    out_bf = jax.block_until_ready(out_bf)
    ref_bf = mlp_reference(x, params, sigma=False, mxu_dtype=jnp.bfloat16)
    assert out_bf.shape == (B, 1)
    assert jnp.allclose(out_bf, ref_bf, atol=2e-3, rtol=2e-3)

    # --- sigma=True path (extra ReLU + 0.001 perturbation) on a ragged batch:
    #     exercises tile clamping, zero padding and output slicing -----------------------
    B2 = 100
    x2 = jax.random.normal(kx, (B2, d), jnp.float32)
    out_s = mlp_forward(x2, params, sigma=True, mxu_dtype=jnp.float32)
    out_s = jax.block_until_ready(out_s)
    ref_s = mlp_reference(x2, params, sigma=True)
    assert out_s.shape == (B2, 1)
    assert jnp.allclose(out_s, ref_s, atol=5e-4, rtol=5e-4)

    print("KERNEL_OK")
</pallas_src>

<mosaic_0001>
module attributes {stable_mosaic.version = 11 : i64} {
  func.func @_mlp_kernel(%arg0: i32, %arg1: memref<16x512xf32, #tpu.memory_space<vmem>>, %arg2: memref<64x16xf32, #tpu.memory_space<vmem>>, %arg3: memref<64x1xf32, #tpu.memory_space<vmem>>, %arg4: memref<64x64xf32, #tpu.memory_space<vmem>>, %arg5: memref<64x1xf32, #tpu.memory_space<vmem>>, %arg6: memref<8x64xf32, #tpu.memory_space<vmem>>, %arg7: memref<1x1xf32, #tpu.memory_space<vmem>>, %arg8: memref<1x512xf32, #tpu.memory_space<vmem>>) attributes {dimension_semantics = [#tpu.dimension_semantics<parallel>], iteration_bounds = array<i64: 2>, scalar_prefetch = 0 : i64, scratch_operands = 0 : i64, tpu.core_type = #tpu.core_type<tc>, window_params = [{transform_indices = @transform_0, window_bounds = array<i64: 16, 512>}, {pipeline_mode = #tpu.pipeline_mode<synchronous>, transform_indices = @transform_1, window_bounds = array<i64: 64, 16>}, {pipeline_mode = #tpu.pipeline_mode<synchronous>, transform_indices = @transform_2, window_bounds = array<i64: 64, 1>}, {pipeline_mode = #tpu.pipeline_mode<synchronous>, transform_indices = @transform_3, window_bounds = array<i64: 64, 64>}, {pipeline_mode = #tpu.pipeline_mode<synchronous>, transform_indices = @transform_4, window_bounds = array<i64: 64, 1>}, {pipeline_mode = #tpu.pipeline_mode<synchronous>, transform_indices = @transform_5, window_bounds = array<i64: 8, 64>}, {pipeline_mode = #tpu.pipeline_mode<synchronous>, transform_indices = @transform_6, window_bounds = array<i64: 1, 1>}, {transform_indices = @transform_7, window_bounds = array<i64: 1, 512>}]} {
    %c0 = arith.constant 0 : index
    %c0_0 = arith.constant 0 : index
    %0 = vector.load %arg1[%c0, %c0_0] : memref<16x512xf32, #tpu.memory_space<vmem>>, vector<16x512xf32>
    %c0_1 = arith.constant 0 : index
    %c0_2 = arith.constant 0 : index
    %1 = vector.load %arg2[%c0_1, %c0_2] : memref<64x16xf32, #tpu.memory_space<vmem>>, vector<64x16xf32>
    %cst = arith.constant dense<0.000000e+00> : vector<64x512xf32>
    %2 = tpu.matmul %1, %0, %cst {dimension_numbers = #tpu.dot_dimension_numbers<[1], [0], [0], [1], [0, 0, 1, 1], [], []>} : vector<64x16xf32>, vector<16x512xf32>, vector<64x512xf32> -> vector<64x512xf32>
    %c0_3 = arith.constant 0 : index
    %c0_4 = arith.constant 0 : index
    %3 = vector.load %arg3[%c0_3, %c0_4] : memref<64x1xf32, #tpu.memory_space<vmem>>, vector<64x1xf32>
    %4 = vector.broadcast %3 : vector<64x1xf32> to vector<64x512xf32>
    %5 = arith.addf %2, %4 : vector<64x512xf32>
    %cst_5 = arith.constant 0.000000e+00 : f32
    %6 = vector.broadcast %cst_5 : f32 to vector<64x512xf32>
    %7 = arith.maximumf %5, %6 : vector<64x512xf32>
    %c0_6 = arith.constant 0 : index
    %c0_7 = arith.constant 0 : index
    %8 = vector.load %arg4[%c0_6, %c0_7] : memref<64x64xf32, #tpu.memory_space<vmem>>, vector<64x64xf32>
    %cst_8 = arith.constant dense<0.000000e+00> : vector<64x512xf32>
    %9 = tpu.matmul %8, %7, %cst_8 {dimension_numbers = #tpu.dot_dimension_numbers<[1], [0], [0], [1], [0, 0, 1, 1], [], []>} : vector<64x64xf32>, vector<64x512xf32>, vector<64x512xf32> -> vector<64x512xf32>
    %c0_9 = arith.constant 0 : index
    %c0_10 = arith.constant 0 : index
    %10 = vector.load %arg5[%c0_9, %c0_10] : memref<64x1xf32, #tpu.memory_space<vmem>>, vector<64x1xf32>
    %11 = vector.broadcast %10 : vector<64x1xf32> to vector<64x512xf32>
    %12 = arith.addf %9, %11 : vector<64x512xf32>
    %cst_11 = arith.constant 0.000000e+00 : f32
    %13 = vector.broadcast %cst_11 : f32 to vector<64x512xf32>
    %14 = arith.maximumf %12, %13 : vector<64x512xf32>
    %c0_12 = arith.constant 0 : index
    %c0_13 = arith.constant 0 : index
    %15 = vector.load %arg6[%c0_12, %c0_13] : memref<8x64xf32, #tpu.memory_space<vmem>>, vector<8x64xf32>
    %cst_14 = arith.constant dense<0.000000e+00> : vector<8x512xf32>
    %16 = tpu.matmul %15, %14, %cst_14 {dimension_numbers = #tpu.dot_dimension_numbers<[1], [0], [0], [1], [0, 0, 1, 1], [], []>} : vector<8x64xf32>, vector<64x512xf32>, vector<8x512xf32> -> vector<8x512xf32>
    %17 = vector.extract_strided_slice %16 {offsets = [0, 0], sizes = [1, 512], strides = [1, 1]} : vector<8x512xf32> to vector<1x512xf32>
    %c0_15 = arith.constant 0 : index
    %c0_16 = arith.constant 0 : index
    %18 = vector.load %arg7[%c0_15, %c0_16] : memref<1x1xf32, #tpu.memory_space<vmem>>, vector<1x1xf32>
    %19 = vector.broadcast %18 : vector<1x1xf32> to vector<1x512xf32>
    %20 = arith.addf %17, %19 : vector<1x512xf32>
    %c0_17 = arith.constant 0 : index
    %c0_18 = arith.constant 0 : index
    %21 = vector.load %arg8[%c0_17, %c0_18] : memref<1x512xf32, #tpu.memory_space<vmem>>, vector<1x512xf32>
    tpu.vector_store %arg8[%c0_17, %c0_18], %20 {strides = array<i32>} : memref<1x512xf32, #tpu.memory_space<vmem>>, vector<1x512xf32>,
    return
  }
  func.func @transform_0(%arg0: i32) -> (i32, i32) {
    %c0_i32 = arith.constant 0 : i32
    %c0_i32_0 = arith.constant 0 : i32
    return %c0_i32, %arg0 : i32, i32
  }
  func.func @transform_1(%arg0: i32) -> (i32, i32) {
    %c0_i32 = arith.constant 0 : i32
    %c0_i32_0 = arith.constant 0 : i32
    %c0_i32_1 = arith.constant 0 : i32
    return %c0_i32, %c0_i32_0 : i32, i32
  }
  func.func @transform_2(%arg0: i32) -> (i32, i32) {
    %c0_i32 = arith.constant 0 : i32
    %c0_i32_0 = arith.constant 0 : i32
    %c0_i32_1 = arith.constant 0 : i32
    return %c0_i32, %c0_i32_0 : i32, i32
  }
  func.func @transform_3(%arg0: i32) -> (i32, i32) {
    %c0_i32 = arith.constant 0 : i32
    %c0_i32_0 = arith.constant 0 : i32
    %c0_i32_1 = arith.constant 0 : i32
    return %c0_i32, %c0_i32_0 : i32, i32
  }
  func.func @transform_4(%arg0: i32) -> (i32, i32) {
    %c0_i32 = arith.constant 0 : i32
    %c0_i32_0 = arith.constant 0 : i32
    %c0_i32_1 = arith.constant 0 : i32
    return %c0_i32, %c0_i32_0 : i32, i32
  }
  func.func @transform_5(%arg0: i32) -> (i32, i32) {
    %c0_i32 = arith.constant 0 : i32
    %c0_i32_0 = arith.constant 0 : i32
    %c0_i32_1 = arith.constant 0 : i32
    return %c0_i32, %c0_i32_0 : i32, i32
  }
  func.func @transform_6(%arg0: i32) -> (i32, i32) {
    %c0_i32 = arith.constant 0 : i32
    %c0_i32_0 = arith.constant 0 : i32
    %c0_i32_1 = arith.constant 0 : i32
    return %c0_i32, %c0_i32_0 : i32, i32
  }
  func.func @transform_7(%arg0: i32) -> (i32, i32) {
    %c0_i32 = arith.constant 0 : i32
    %c0_i32_0 = arith.constant 0 : i32
    return %c0_i32, %arg0 : i32, i32
  }
}

</mosaic_0001>

<llo_original>
// kernel: tpu_custom_call.1
$region0: #{tpu_custom_call.1}
  #allocation0 [shape = 'u32[]', space=smem, size = 0x4, offset = 0x4, fixed_abs, tag = 'smem constant byte address 0x4 - core index']
  #allocation1 [shape = 'u32[72,128]{1,0:T(1,128)}', space=vmem, size = 0x9000, scoped, tag = 'internal scratch']
  #allocation2 [shape = 'f32[1,1]{1,0:T(1,128)S(1)}', space=vmem, size = 0x200, scoped, tag = 'scoped memory for tpu_custom_call.1']
  %s0 = inlined_call_operand.vmem [shape: f32[16,1024], index: 0, kind: input, shape index: {}]
  %s1 = inlined_call_operand.vmem [shape: f32[64,16], index: 1, kind: input, shape index: {}]
  %s2 = inlined_call_operand.vmem [shape: f32[64,1], index: 2, kind: input, shape index: {}]
  %s3 = inlined_call_operand.vmem [shape: f32[64,64], index: 3, kind: input, shape index: {}]
  %s4 = inlined_call_operand.vmem [shape: f32[64,1], index: 4, kind: input, shape index: {}]
  %s5 = inlined_call_operand.vmem [shape: f32[8,64], index: 5, kind: input, shape index: {}]
  %s6 = inlined_call_operand.<no memory space> [shape: f32[1,1], index: 6, kind: input, shape index: {}]
  %s7 = inlined_call_operand.hbm [shape: f32[1,1024], index: 7, kind: output, shape index: {}]
  %s8 = sld [smem:[#allocation0]]
  $region84: #{tpu_custom_call.1} parent=0
    _
  %s10 = ssub.s32 1, %s8
  %s11 = scalar_select 0, %s10, %s8
  %v12 = vstv %s6
  %13 = vst [vmem:[#allocation2] sm:$0x1] %v12
  $region1: #{tpu_custom_call.1} parent=0
    #allocation3 [shape = 'u8[65536]{0}', space=vmem, size = 0x10000, scoped, tag = 'input window, operand 0']
    #allocation4 [shape = 'u8[4096]{0}', space=vmem, size = 0x1000, scoped, tag = 'output window, operand 0']
    #allocation5 [shape = 's32[2]{0}', space=sflag, size = 0x8, scoped, tag = 'scoped memory for tpu_custom_call.1']
    %14 = vsyncpa [#allocation5], 0
    %s15 = scalar_lea.sflag [#allocation5], 1
    %16 = vsyncpa %s15, 0
    loop: start=0, step=1, limit=4
    $region2: #{tpu_custom_call.1} parent=1 // loop_pre_header
      _
    $region3: #{tpu_custom_call.1} parent=1 // loop_header
      %s18 = sphi 0, %s22
      %p19 = scmp.ge.s32.totalorder %s18, 4
      %s28 = sphi 0, %s30
      %s31 = sphi 0, %s28
      %s32 = sphi 0, %s31
      %s48 = sphi 0, %s32
      %s52 = sphi 0, %s52
      %s54 = sphi 0, %s52
      %s55 = sphi 0, %s54
      %s69 = sphi 0, %s55
      %s73 = sphi 0, %s73
      %s75 = sphi 0, %s73
      %s76 = sphi 0, %s75
      %s90 = sphi 0, %s76
      %s94 = sphi 0, %s94
      %s96 = sphi 0, %s94
      %s97 = sphi 0, %s96
      %s111 = sphi 0, %s97
      %s115 = sphi 0, %s115
      %s117 = sphi 0, %s115
      %s118 = sphi 0, %s117
      %s132 = sphi 0, %s118
      %s136 = sphi 0, %s136
      %s138 = sphi 0, %s136
      %s139 = sphi 0, %s138
      %s153 = sphi 0, %s139
      %s157 = sphi 0, %s157
      %s159 = sphi 0, %s157
      %s160 = sphi 0, %s159
      %s174 = sphi 0, %s160
      %s180 = sphi 0, %s182
      %s183 = sphi 0, %s180
      %s184 = sphi 0, %s183
      %s200 = sphi 0, %s184
    $region4: #{tpu_custom_call.1} parent=1 // loop_header_branch
      %21 = sbr.rel (%p19) target = $region8
    $region5: #{tpu_custom_call.1} parent=1 // loop_body
      %s23 = ssub.s32 %s18, 1
      %s24 = ssub.s32 %s18, 2
      %s25 = sadd.s32 %s18, 1
      %s26 = ssub.s32 %s18, %s25
      %p27 = scmp.eq.s32.totalorder %s26, 0
      %s29 = sadd.s32 %s28, 1
      %s30 = scalar_select %p27, %s28, %s29
      %p33 = pneg %p27
      %p34 = scmp.eq.s32.totalorder %s18, 1
      %p35 = por %p33, %p34
      %p36 = scmp.ne.s32.totalorder %s28, %s31
      %p37 = scmp.eq.s32.totalorder %s18, 0
      %p38 = por %p36, %p37
      %p39 = scmp.ne.s32.totalorder %s28, %s31
      %p40 = scmp.eq.s32.totalorder %s23, 1
      %p41 = por %p39, %p40
      %p42 = scmp.ne.s32.totalorder %s31, %s32
      %p43 = scmp.eq.s32.totalorder %s23, 0
      %p44 = por %p42, %p43
      %p45 = scmp.ne.s32.totalorder %s31, %s32
      %p46 = scmp.eq.s32.totalorder %s24, 1
      %p47 = por %p45, %p46
      %p49 = scmp.ne.s32.totalorder %s32, %s48
      %p50 = scmp.eq.s32.totalorder %s24, 0
      %p51 = por %p49, %p50
      %s53 = sadd.s32 %s52, 1
      %p56 = scmp.eq.s32.totalorder %s18, 1
      %p57 = scmp.ne.s32.totalorder %s52, %s54
      %p58 = scmp.eq.s32.totalorder %s18, 0
      %p59 = por %p57, %p58
      %p60 = scmp.ne.s32.totalorder %s52, %s54
      %p61 = scmp.eq.s32.totalorder %s23, 1
      %p62 = por %p60, %p61
      %p63 = scmp.ne.s32.totalorder %s54, %s55
      %p64 = scmp.eq.s32.totalorder %s23, 0
      %p65 = por %p63, %p64
      %p66 = scmp.ne.s32.totalorder %s54, %s55
      %p67 = scmp.eq.s32.totalorder %s24, 1
      %p68 = por %p66, %p67
      %p70 = scmp.ne.s32.totalorder %s55, %s69
      %p71 = scmp.eq.s32.totalorder %s24, 0
      %p72 = por %p70, %p71
      %s74 = sadd.s32 %s73, 1
      %p77 = scmp.eq.s32.totalorder %s18, 1
      %p78 = scmp.ne.s32.totalorder %s73, %s75
      %p79 = scmp.eq.s32.totalorder %s18, 0
      %p80 = por %p78, %p79
      %p81 = scmp.ne.s32.totalorder %s73, %s75
      %p82 = scmp.eq.s32.totalorder %s23, 1
      %p83 = por %p81, %p82
      %p84 = scmp.ne.s32.totalorder %s75, %s76
      %p85 = scmp.eq.s32.totalorder %s23, 0
      %p86 = por %p84, %p85
      %p87 = scmp.ne.s32.totalorder %s75, %s76
      %p88 = scmp.eq.s32.totalorder %s24, 1
      %p89 = por %p87, %p88
      %p91 = scmp.ne.s32.totalorder %s76, %s90
      %p92 = scmp.eq.s32.totalorder %s24, 0
      %p93 = por %p91, %p92
      %s95 = sadd.s32 %s94, 1
      %p98 = scmp.eq.s32.totalorder %s18, 1
      %p99 = scmp.ne.s32.totalorder %s94, %s96
      %p100 = scmp.eq.s32.totalorder %s18, 0
      %p101 = por %p99, %p100
      %p102 = scmp.ne.s32.totalorder %s94, %s96
      %p103 = scmp.eq.s32.totalorder %s23, 1
      %p104 = por %p102, %p103
      %p105 = scmp.ne.s32.totalorder %s96, %s97
      %p106 = scmp.eq.s32.totalorder %s23, 0
      %p107 = por %p105, %p106
      %p108 = scmp.ne.s32.totalorder %s96, %s97
      %p109 = scmp.eq.s32.totalorder %s24, 1
      %p110 = por %p108, %p109
      %p112 = scmp.ne.s32.totalorder %s97, %s111
      %p113 = scmp.eq.s32.totalorder %s24, 0
      %p114 = por %p112, %p113
      %s116 = sadd.s32 %s115, 1
      %p119 = scmp.eq.s32.totalorder %s18, 1
      %p120 = scmp.ne.s32.totalorder %s115, %s117
      %p121 = scmp.eq.s32.totalorder %s18, 0
      %p122 = por %p120, %p121
      %p123 = scmp.ne.s32.totalorder %s115, %s117
      %p124 = scmp.eq.s32.totalorder %s23, 1
      %p125 = por %p123, %p124
      %p126 = scmp.ne.s32.totalorder %s117, %s118
      %p127 = scmp.eq.s32.totalorder %s23, 0
      %p128 = por %p126, %p127
      %p129 = scmp.ne.s32.totalorder %s117, %s118
      %p130 = scmp.eq.s32.totalorder %s24, 1
      %p131 = por %p129, %p130
      %p133 = scmp.ne.s32.totalorder %s118, %s132
      %p134 = scmp.eq.s32.totalorder %s24, 0
      %p135 = por %p133, %p134
      %s137 = sadd.s32 %s136, 1
      %p140 = scmp.eq.s32.totalorder %s18, 1
      %p141 = scmp.ne.s32.totalorder %s136, %s138
      %p142 = scmp.eq.s32.totalorder %s18, 0
      %p143 = por %p141, %p142
      %p144 = scmp.ne.s32.totalorder %s136, %s138
      %p145 = scmp.eq.s32.totalorder %s23, 1
      %p146 = por %p144, %p145
      %p147 = scmp.ne.s32.totalorder %s138, %s139
      %p148 = scmp.eq.s32.totalorder %s23, 0
      %p149 = por %p147, %p148
      %p150 = scmp.ne.s32.totalorder %s138, %s139
      %p151 = scmp.eq.s32.totalorder %s24, 1
      %p152 = por %p150, %p151
      %p154 = scmp.ne.s32.totalorder %s139, %s153
      %p155 = scmp.eq.s32.totalorder %s24, 0
      %p156 = por %p154, %p155
      %s158 = sadd.s32 %s157, 1
      %p161 = scmp.eq.s32.totalorder %s18, 1
      %p162 = scmp.ne.s32.totalorder %s157, %s159
      %p163 = scmp.eq.s32.totalorder %s18, 0
      %p164 = por %p162, %p163
      %p165 = scmp.ne.s32.totalorder %s157, %s159
      %p166 = scmp.eq.s32.totalorder %s23, 1
      %p167 = por %p165, %p166
      %p168 = scmp.ne.s32.totalorder %s159, %s160
      %p169 = scmp.eq.s32.totalorder %s23, 0
      %p170 = por %p168, %p169
      %p171 = scmp.ne.s32.totalorder %s159, %s160
      %p172 = scmp.eq.s32.totalorder %s24, 1
      %p173 = por %p171, %p172
      %p175 = scmp.ne.s32.totalorder %s160, %s174
      %p176 = scmp.eq.s32.totalorder %s24, 0
      %p177 = por %p175, %p176
      %s178 = ssub.s32 %s18, %s25
      %p179 = scmp.eq.s32.totalorder %s178, 0
      %s181 = sadd.s32 %s180, 1
      %s182 = scalar_select %p179, %s180, %s181
      %p185 = pneg %p179
      %p186 = scmp.eq.s32.totalorder %s18, 1
      %p187 = por %p185, %p186
      %p188 = scmp.ne.s32.totalorder %s180, %s183
      %p189 = scmp.eq.s32.totalorder %s18, 0
      %p190 = por %p188, %p189
      %p191 = scmp.ne.s32.totalorder %s180, %s183
      %p192 = scmp.eq.s32.totalorder %s23, 1
      %p193 = por %p191, %p192
      %p194 = scmp.ne.s32.totalorder %s183, %s184
      %p195 = scmp.eq.s32.totalorder %s23, 0
      %p196 = por %p194, %p195
      %p197 = scmp.ne.s32.totalorder %s183, %s184
      %p198 = scmp.eq.s32.totalorder %s24, 1
      %p199 = por %p197, %p198
      %p201 = scmp.ne.s32.totalorder %s184, %s200
      %p202 = scmp.eq.s32.totalorder %s24, 0
      %p203 = por %p201, %p202
      %p204 = scmp.le.s32.totalorder 1, %s18
      %p205 = scmp.lt.s32.totalorder %s18, 3
      %p206 = pnand %p204, %p205
      %p207 = pneg %p206
      // Predicated region
      $region9: #{tpu_custom_call.1} parent=5 // pred_check
        _
      $region10: #{tpu_custom_call.1} parent=5 // pred_check_branch
        %209 = sbr.rel (%p206) target = $region12
      $region11: #{tpu_custom_call.1} parent=5 // pred_region
        %s210 = ssub.s32 %s18, 1
        // Predicated region
        $region13: #{tpu_custom_call.1} parent=11 // pred_check
          %p211 = pneg %p65
        $region14: #{tpu_custom_call.1} parent=11 // pred_check_branch
          %213 = sbr.rel (%p211) target = $region16
        $region15: #{tpu_custom_call.1} parent=11 // pred_region
          _
        $region16: #{tpu_custom_call.1} parent=11 // pred_fallthru
          _
        // Predicated region
        $region17: #{tpu_custom_call.1} parent=11 // pred_check
          %p214 = pneg %p86
        $region18: #{tpu_custom_call.1} parent=11 // pred_check_branch
          %216 = sbr.rel (%p214) target = $region20
        $region19: #{tpu_custom_call.1} parent=11 // pred_region
          _
        $region20: #{tpu_custom_call.1} parent=11 // pred_fallthru
          _
        // Predicated region
        $region21: #{tpu_custom_call.1} parent=11 // pred_check
          %p217 = pneg %p107
        $region22: #{tpu_custom_call.1} parent=11 // pred_check_branch
          %219 = sbr.rel (%p217) target = $region24
        $region23: #{tpu_custom_call.1} parent=11 // pred_region
          _
        $region24: #{tpu_custom_call.1} parent=11 // pred_fallthru
          _
        // Predicated region
        $region25: #{tpu_custom_call.1} parent=11 // pred_check
          %p220 = pneg %p128
        $region26: #{tpu_custom_call.1} parent=11 // pred_check_branch
          %222 = sbr.rel (%p220) target = $region28
        $region27: #{tpu_custom_call.1} parent=11 // pred_region
          _
        $region28: #{tpu_custom_call.1} parent=11 // pred_fallthru
          _
        // Predicated region
        $region29: #{tpu_custom_call.1} parent=11 // pred_check
          %p223 = pneg %p149
        $region30: #{tpu_custom_call.1} parent=11 // pred_check_branch
          %225 = sbr.rel (%p223) target = $region32
        $region31: #{tpu_custom_call.1} parent=11 // pred_region
          _
        $region32: #{tpu_custom_call.1} parent=11 // pred_fallthru
          _
        // Predicated region
        $region33: #{tpu_custom_call.1} parent=11 // pred_check
          %p226 = pneg %p170
        $region34: #{tpu_custom_call.1} parent=11 // pred_check_branch
          %228 = sbr.rel (%p226) target = $region36
        $region35: #{tpu_custom_call.1} parent=11 // pred_region
          _
        $region36: #{tpu_custom_call.1} parent=11 // pred_fallthru
          _
      $region12: #{tpu_custom_call.1} parent=5 // pred_fallthru
        _
      %p229 = scmp.lt.s32.totalorder %s18, 2
      // Predicated region
      $region37: #{tpu_custom_call.1} parent=5 // pred_check
        %p230 = pneg %p229
      $region38: #{tpu_custom_call.1} parent=5 // pred_check_branch
        %232 = sbr.rel (%p230) target = $region40
      $region39: #{tpu_custom_call.1} parent=5 // pred_region
        // Predicated region
        $region41: #{tpu_custom_call.1} parent=39 // pred_check
          %p233 = pneg %p38
        $region42: #{tpu_custom_call.1} parent=39 // pred_check_branch
          %235 = sbr.rel (%p233) target = $region44
        $region43: #{tpu_custom_call.1} parent=39 // pred_region
          %s236 = sand.u32 %s28, 1
          %s237 = sand.u32 %s28, 1
          %s238 = smul.addr %s237, 64
          %s239 = scalar_lea.vmem [#allocation3], %s238
          %s240 = smul.u32 4, %s18
          %s241 = smul.addr %s240, 8
          %s242 = scalar_lea.vmem %s0, %s241
          // Predicated region
          $region45: #{tpu_custom_call.1} parent=43 // pred_check
            _
          $region46: #{tpu_custom_call.1} parent=43 // pred_check_branch
            %244 = sbr.rel (0) target = $region48
          $region47: #{tpu_custom_call.1} parent=43 // pred_region
            // Predicated region
            $region49: #{tpu_custom_call.1} parent=47 // pred_check
              _
            $region50: #{tpu_custom_call.1} parent=47 // pred_check_branch
              %246 = sbr.rel (0) target = $region52
            $region51: #{tpu_custom_call.1} parent=47 // pred_region
              loop: start=0, step=1, limit=1
              $region53: #{tpu_custom_call.1} parent=51 // loop_pre_header
                _
              $region54: #{tpu_custom_call.1} parent=51 // loop_header
                %s248 = sphi 0, %s252
                %p249 = scmp.ge.s32.totalorder %s248, 1
                %s253 = sphi %s242, %s242
                %s254 = sphi %s239, %s239
              $region55: #{tpu_custom_call.1} parent=51 // loop_header_branch
                %251 = sbr.rel (%p249) target = $region59
              $region56: #{tpu_custom_call.1} parent=51 // loop_body
                %v255 = vld [vmem:[%s253] sm:$0xff]
                %256 = vst [vmem:[%s254] sm:$0xff] %v255
                %v257 = vld [vmem:[%s253 + $0x8] sm:$0xff]
                %258 = vst [vmem:[%s254 + $0x8] sm:$0xff] %v257
                %v259 = vld [vmem:[%s253 + $0x10] sm:$0xff]
                %260 = vst [vmem:[%s254 + $0x10] sm:$0xff] %v259
                %v261 = vld [vmem:[%s253 + $0x18] sm:$0xff]
                %262 = vst [vmem:[%s254 + $0x18] sm:$0xff] %v261
                %v263 = vld [vmem:[%s253 + $0x40] sm:$0xff]
                %264 = vst [vmem:[%s254 + $0x20] sm:$0xff] %v263
                %v265 = vld [vmem:[%s253 + $0x48] sm:$0xff]
                %266 = vst [vmem:[%s254 + $0x28] sm:$0xff] %v265
                %v267 = vld [vmem:[%s253 + $0x50] sm:$0xff]
                %268 = vst [vmem:[%s254 + $0x30] sm:$0xff] %v267
                %v269 = vld [vmem:[%s253 + $0x58] sm:$0xff]
                %270 = vst [vmem:[%s254 + $0x38] sm:$0xff] %v269
              $region57: #{tpu_custom_call.1} parent=51 // loop_footer
                %s252 = sadd.s32 1, %s248
              $region58: #{tpu_custom_call.1} parent=51 // loop_footer_branch
                %247 = sbr.rel target = $region54
              $region59: #{tpu_custom_call.1} parent=51 // loop_exit
                _
            $region52: #{tpu_custom_call.1} parent=47 // pred_fallthru
              _
            // Predicated region
            $region60: #{tpu_custom_call.1} parent=47 // pred_check
              _
            $region61: #{tpu_custom_call.1} parent=47 // pred_check_branch
              %272 = sbr.rel target = $region63
            $region62: #{tpu_custom_call.1} parent=47 // pred_region
              _
            $region63: #{tpu_custom_call.1} parent=47 // pred_fallthru
              _
          $region48: #{tpu_custom_call.1} parent=43 // pred_fallthru
            _
          %273 = vnop
        $region44: #{tpu_custom_call.1} parent=39 // pred_fallthru
          _
      $region40: #{tpu_custom_call.1} parent=5 // pred_fallthru
        _
      %p274 = scmp.le.s32.totalorder 1, %s18
      %p275 = scmp.lt.s32.totalorder %s18, 3
      %p276 = pnand %p274, %p275
      %p277 = pneg %p276
      // Predicated region
      $region64: #{tpu_custom_call.1} parent=5 // pred_check
        _
      $region65: #{tpu_custom_call.1} parent=5 // pred_check_branch
        %279 = sbr.rel (%p276) target = $region67
      $region66: #{tpu_custom_call.1} parent=5 // pred_region
        %s280 = ssub.s32 %s18, 1
        %s281 = sand.u32 %s31, 1
        %s282 = sand.u32 %s31, 1
        %s283 = smul.addr %s282, 64
        %s284 = scalar_lea.vmem [#allocation3], %s283
        // Predicated region
        $region68: #{tpu_custom_call.1} parent=66 // pred_check
          %p285 = pneg %p44
        $region69: #{tpu_custom_call.1} parent=66 // pred_check_branch
          %287 = sbr.rel (%p285) target = $region71
        $region70: #{tpu_custom_call.1} parent=66 // pred_region
          _
        $region71: #{tpu_custom_call.1} parent=66 // pred_fallthru
          _
        %s288 = sand.u32 %s31, 1
        %s289 = sand.u32 %s31, 1
        %s290 = smul.addr %s289, 64
        %s291 = scalar_lea.vmem [#allocation3], %s290
        %p292 = pneg %p44
        %p293 = pneg %p41
        %p294 = pneg %p65
        %p295 = pneg %p62
        %p296 = pneg %p86
        %p297 = pneg %p83
        %p298 = pneg %p107
        %p299 = pneg %p104
        %p300 = pneg %p128
        %p301 = pneg %p125
        %p302 = pneg %p149
        %p303 = pneg %p146
        %p304 = pneg %p170
        %p305 = pneg %p167
        %p306 = pneg %p196
        %p307 = pneg %p193
        %s308 = sand.u32 %s183, 1
        %s309 = scalar_lea.sflag [#allocation5], %s308
        %s310 = sand.u32 %s183, 1
        %s311 = smul.addr %s310, 4
        %s312 = scalar_lea.vmem [#allocation4], %s311
        %s313 = smul.u32 4, %s23
        %s314 = smul.u32 4, %s23
        %v315 = vld [vmem:[%s284] sm:$0xff]
        %v316 = vld [vmem:[%s284 + $0x8] sm:$0xff]
        %v317 = vld [vmem:[%s284 + $0x10] sm:$0xff]
        %v318 = vld [vmem:[%s284 + $0x18] sm:$0xff]
        %v319 = vld [vmem:[%s284 + $0x20] sm:$0xff]
        %v320 = vld [vmem:[%s284 + $0x28] sm:$0xff]
        %v321 = vld [vmem:[%s284 + $0x30] sm:$0xff]
        %v322 = vld [vmem:[%s284 + $0x38] sm:$0xff]
        %v323 = vld [vmem:[%s1] sm:$0xff]
        %v324 = vld [vmem:[%s1 + $0x8] sm:$0xff]
        %v325 = vld [vmem:[%s1 + $0x10] sm:$0xff]
        %v326 = vld [vmem:[%s1 + $0x18] sm:$0xff]
        %v327 = vld [vmem:[%s1 + $0x20] sm:$0xff]
        %v328 = vld [vmem:[%s1 + $0x28] sm:$0xff]
        %v329 = vld [vmem:[%s1 + $0x30] sm:$0xff]
        %v330 = vld [vmem:[%s1 + $0x38] sm:$0xff]
        %v331 = vld [vmem:[%s2] sm:$0xff]
        %v332 = vld [vmem:[%s2 + $0x8] sm:$0xff]
        %v333 = vld [vmem:[%s2 + $0x10] sm:$0xff]
        %v334 = vld [vmem:[%s2 + $0x18] sm:$0xff]
        %v335 = vld [vmem:[%s2 + $0x20] sm:$0xff]
        %v336 = vld [vmem:[%s2 + $0x28] sm:$0xff]
        %v337 = vld [vmem:[%s2 + $0x30] sm:$0xff]
        %v338 = vld [vmem:[%s2 + $0x38] sm:$0xff]
        %340 = vset.pattern.permute.xlu0 0
        %341 = vperm.xlu0 %340, %v331
        %v342 = vpop.permute.xlu0 %341
        %345 = vset.pattern.permute.xlu0 0
        %346 = vperm.xlu0 %345, %v332
        %v347 = vpop.permute.xlu0 %346
        %350 = vset.pattern.permute.xlu0 0
        %351 = vperm.xlu0 %350, %v333
        %v352 = vpop.permute.xlu0 %351
        %355 = vset.pattern.permute.xlu0 0
        %356 = vperm.xlu0 %355, %v334
        %v357 = vpop.permute.xlu0 %356
        %360 = vset.pattern.permute.xlu0 0
        %361 = vperm.xlu0 %360, %v335
        %v362 = vpop.permute.xlu0 %361
        %365 = vset.pattern.permute.xlu0 0
        %366 = vperm.xlu0 %365, %v336
        %v367 = vpop.permute.xlu0 %366
        %370 = vset.pattern.permute.xlu0 0
        %371 = vperm.xlu0 %370, %v337
        %v372 = vpop.permute.xlu0 %371
        %375 = vset.pattern.permute.xlu0 0
        %376 = vperm.xlu0 %375, %v338
        %v377 = vpop.permute.xlu0 %376
        %vm379 = vcmask 130048
        %v381 = vsel %vm379, %v323, 0
        %v384 = vsel %vm379, %v324, 0
        %v387 = vsel %vm379, %v325, 0
        %v390 = vsel %vm379, %v326, 0
        %v393 = vsel %vm379, %v327, 0
        %v396 = vsel %vm379, %v328, 0
        %v399 = vsel %vm379, %v329, 0
        %v402 = vsel %vm379, %v330, 0
        %404 = vmatpush.msra.mxu0 0.0
        %405 = vmatpush.msra.mxu0 0.0
        %406 = vmatpush.msra.mxu0 0.0
        %407 = vmatpush.msra.mxu0 0.0
        %408 = vmatpush.msra.mxu0 0.0
        %409 = vmatpush.msra.mxu0 0.0
        %410 = vmatpush.msra.mxu0 0.0
        %411 = vmatpush.msra.mxu0 0.0
        %412 = vmatpush.msra.mxu0 0.0
        %413 = vmatpush.msra.mxu0 0.0
        %414 = vmatpush.msra.mxu0 0.0
        %415 = vmatpush.msra.mxu0 0.0
        %416 = vmatpush.msra.mxu0 0.0
        %417 = vmatpush.msra.mxu0 0.0
        %418 = vmatpush.msra.mxu0 %v319
        %419 = vmatpush.msra.mxu0 %v315
        %420 = vmatmul.f32.gmra.mxu0 %v381
        %v421 = vpop.f32.mrf.mxu0
        %v422 = vadd.f32 %v342, %v421
        %423 = vmatmul.f32.gmra.mxu0 %v384
        %v424 = vpop.f32.mrf.mxu0
        %v425 = vadd.f32 %v347, %v424
        %426 = vmatmul.f32.gmra.mxu0 %v387
        %v427 = vpop.f32.mrf.mxu0
        %v428 = vadd.f32 %v352, %v427
        %429 = vmatmul.f32.gmra.mxu0 %v390
        %v430 = vpop.f32.mrf.mxu0
        %v431 = vadd.f32 %v357, %v430
        %432 = vmatmul.f32.gmra.mxu0 %v393
        %v433 = vpop.f32.mrf.mxu0
        %v434 = vadd.f32 %v362, %v433
        %435 = vmatmul.f32.gmra.mxu0 %v396
        %v436 = vpop.f32.mrf.mxu0
        %v437 = vadd.f32 %v367, %v436
        %438 = vmatmul.f32.gmra.mxu0 %v399
        %v439 = vpop.f32.mrf.mxu0
        %v440 = vadd.f32 %v372, %v439
        %441 = vmatmul.f32.gmra.mxu0 %v402
        %v442 = vpop.f32.mrf.mxu0
        %v443 = vadd.f32 %v377, %v442
        %444 = vdwg.mxu0
        %445 = vmatpush.msra.mxu0 0.0
        %446 = vmatpush.msra.mxu0 0.0
        %447 = vmatpush.msra.mxu0 0.0
        %448 = vmatpush.msra.mxu0 0.0
        %449 = vmatpush.msra.mxu0 0.0
        %450 = vmatpush.msra.mxu0 0.0
        %451 = vmatpush.msra.mxu0 0.0
        %452 = vmatpush.msra.mxu0 0.0
        %453 = vmatpush.msra.mxu0 0.0
        %454 = vmatpush.msra.mxu0 0.0
        %455 = vmatpush.msra.mxu0 0.0
        %456 = vmatpush.msra.mxu0 0.0
        %457 = vmatpush.msra.mxu0 0.0
        %458 = vmatpush.msra.mxu0 0.0
        %459 = vmatpush.msra.mxu0 %v320
        %460 = vmatpush.msra.mxu0 %v316
        %461 = vmatmul.f32.gmra.mxu0 %v381
        %v462 = vpop.f32.mrf.mxu0
        %v463 = vadd.f32 %v342, %v462
        %464 = vmatmul.f32.gmra.mxu0 %v384
        %v465 = vpop.f32.mrf.mxu0
        %v466 = vadd.f32 %v347, %v465
        %467 = vmatmul.f32.gmra.mxu0 %v387
        %v468 = vpop.f32.mrf.mxu0
        %v469 = vadd.f32 %v352, %v468
        %470 = vmatmul.f32.gmra.mxu0 %v390
        %v471 = vpop.f32.mrf.mxu0
        %v472 = vadd.f32 %v357, %v471
        %473 = vmatmul.f32.gmra.mxu0 %v393
        %v474 = vpop.f32.mrf.mxu0
        %v475 = vadd.f32 %v362, %v474
        %476 = vmatmul.f32.gmra.mxu0 %v396
        %v477 = vpop.f32.mrf.mxu0
        %v478 = vadd.f32 %v367, %v477
        %479 = vmatmul.f32.gmra.mxu0 %v399
        %v480 = vpop.f32.mrf.mxu0
        %v481 = vadd.f32 %v372, %v480
        %482 = vmatmul.f32.gmra.mxu0 %v402
        %v483 = vpop.f32.mrf.mxu0
        %v484 = vadd.f32 %v377, %v483
        %485 = vdwg.mxu0
        %486 = vmatpush.msra.mxu0 0.0
        %487 = vmatpush.msra.mxu0 0.0
        %488 = vmatpush.msra.mxu0 0.0
        %489 = vmatpush.msra.mxu0 0.0
        %490 = vmatpush.msra.mxu0 0.0
        %491 = vmatpush.msra.mxu0 0.0
        %492 = vmatpush.msra.mxu0 0.0
        %493 = vmatpush.msra.mxu0 0.0
        %494 = vmatpush.msra.mxu0 0.0
        %495 = vmatpush.msra.mxu0 0.0
        %496 = vmatpush.msra.mxu0 0.0
        %497 = vmatpush.msra.mxu0 0.0
        %498 = vmatpush.msra.mxu0 0.0
        %499 = vmatpush.msra.mxu0 0.0
        %500 = vmatpush.msra.mxu0 %v321
        %501 = vmatpush.msra.mxu0 %v317
        %502 = vmatmul.f32.gmra.mxu0 %v381
        %v503 = vpop.f32.mrf.mxu0
        %v504 = vadd.f32 %v342, %v503
        %505 = vmatmul.f32.gmra.mxu0 %v384
        %v506 = vpop.f32.mrf.mxu0
        %v507 = vadd.f32 %v347, %v506
        %508 = vmatmul.f32.gmra.mxu0 %v387
        %v509 = vpop.f32.mrf.mxu0
        %v510 = vadd.f32 %v352, %v509
        %511 = vmatmul.f32.gmra.mxu0 %v390
        %v512 = vpop.f32.mrf.mxu0
        %v513 = vadd.f32 %v357, %v512
        %514 = vmatmul.f32.gmra.mxu0 %v393
        %v515 = vpop.f32.mrf.mxu0
        %v516 = vadd.f32 %v362, %v515
        %517 = vmatmul.f32.gmra.mxu0 %v396
        %v518 = vpop.f32.mrf.mxu0
        %v519 = vadd.f32 %v367, %v518
        %520 = vmatmul.f32.gmra.mxu0 %v399
        %v521 = vpop.f32.mrf.mxu0
        %v522 = vadd.f32 %v372, %v521
        %523 = vmatmul.f32.gmra.mxu0 %v402
        %v524 = vpop.f32.mrf.mxu0
        %v525 = vadd.f32 %v377, %v524
        %526 = vdwg.mxu0
        %527 = vmatpush.msra.mxu0 0.0
        %528 = vmatpush.msra.mxu0 0.0
        %529 = vmatpush.msra.mxu0 0.0
        %530 = vmatpush.msra.mxu0 0.0
        %531 = vmatpush.msra.mxu0 0.0
        %532 = vmatpush.msra.mxu0 0.0
        %533 = vmatpush.msra.mxu0 0.0
        %534 = vmatpush.msra.mxu0 0.0
        %535 = vmatpush.msra.mxu0 0.0
        %536 = vmatpush.msra.mxu0 0.0
        %537 = vmatpush.msra.mxu0 0.0
        %538 = vmatpush.msra.mxu0 0.0
        %539 = vmatpush.msra.mxu0 0.0
        %540 = vmatpush.msra.mxu0 0.0
        %541 = vmatpush.msra.mxu0 %v322
        %542 = vmatpush.msra.mxu0 %v318
        %543 = vmatmul.f32.gmra.mxu0 %v381
        %v544 = vpop.f32.mrf.mxu0
        %v545 = vadd.f32 %v342, %v544
        %546 = vmatmul.f32.gmra.mxu0 %v384
        %v547 = vpop.f32.mrf.mxu0
        %v548 = vadd.f32 %v347, %v547
        %549 = vmatmul.f32.gmra.mxu0 %v387
        %v550 = vpop.f32.mrf.mxu0
        %v551 = vadd.f32 %v352, %v550
        %552 = vmatmul.f32.gmra.mxu0 %v390
        %v553 = vpop.f32.mrf.mxu0
        %v554 = vadd.f32 %v357, %v553
        %555 = vmatmul.f32.gmra.mxu0 %v393
        %v556 = vpop.f32.mrf.mxu0
        %v557 = vadd.f32 %v362, %v556
        %558 = vmatmul.f32.gmra.mxu0 %v396
        %v559 = vpop.f32.mrf.mxu0
        %v560 = vadd.f32 %v367, %v559
        %561 = vmatmul.f32.gmra.mxu0 %v399
        %v562 = vpop.f32.mrf.mxu0
        %v563 = vadd.f32 %v372, %v562
        %564 = vmatmul.f32.gmra.mxu0 %v402
        %v565 = vpop.f32.mrf.mxu0
        %v566 = vadd.f32 %v377, %v565
        %567 = vdwg.mxu0
        %v568 = vmax.f32 %v422, 0.0
        %v569 = vmax.f32 %v463, 0.0
        %v570 = vmax.f32 %v504, 0.0
        %v571 = vmax.f32 %v545, 0.0
        %v572 = vmax.f32 %v425, 0.0
        %v573 = vmax.f32 %v466, 0.0
        %v574 = vmax.f32 %v507, 0.0
        %v575 = vmax.f32 %v548, 0.0
        %v576 = vmax.f32 %v428, 0.0
        %v577 = vmax.f32 %v469, 0.0
        %v578 = vmax.f32 %v510, 0.0
        %v579 = vmax.f32 %v551, 0.0
        %v580 = vmax.f32 %v431, 0.0
        %v581 = vmax.f32 %v472, 0.0
        %v582 = vmax.f32 %v513, 0.0
        %v583 = vmax.f32 %v554, 0.0
        %v584 = vmax.f32 %v434, 0.0
        %v585 = vmax.f32 %v475, 0.0
        %v586 = vmax.f32 %v516, 0.0
        %v587 = vmax.f32 %v557, 0.0
        %v588 = vmax.f32 %v437, 0.0
        %v589 = vmax.f32 %v478, 0.0
        %v590 = vmax.f32 %v519, 0.0
        %v591 = vmax.f32 %v560, 0.0
        %v592 = vmax.f32 %v440, 0.0
        %v593 = vmax.f32 %v481, 0.0
        %v594 = vmax.f32 %v522, 0.0
        %v595 = vmax.f32 %v563, 0.0
        %v596 = vmax.f32 %v443, 0.0
        %v597 = vmax.f32 %v484, 0.0
        %v598 = vmax.f32 %v525, 0.0
        %v599 = vmax.f32 %v566, 0.0
        %v600 = vld [vmem:[%s3] sm:$0xff]
        %v601 = vld [vmem:[%s3 + $0x8] sm:$0xff]
        %v602 = vld [vmem:[%s3 + $0x10] sm:$0xff]
        %v603 = vld [vmem:[%s3 + $0x18] sm:$0xff]
        %v604 = vld [vmem:[%s3 + $0x20] sm:$0xff]
        %v605 = vld [vmem:[%s3 + $0x28] sm:$0xff]
        %v606 = vld [vmem:[%s3 + $0x30] sm:$0xff]
        %v607 = vld [vmem:[%s3 + $0x38] sm:$0xff]
        %v608 = vld [vmem:[%s4] sm:$0xff]
        %v609 = vld [vmem:[%s4 + $0x8] sm:$0xff]
        %v610 = vld [vmem:[%s4 + $0x10] sm:$0xff]
        %v611 = vld [vmem:[%s4 + $0x18] sm:$0xff]
        %v612 = vld [vmem:[%s4 + $0x20] sm:$0xff]
        %v613 = vld [vmem:[%s4 + $0x28] sm:$0xff]
        %v614 = vld [vmem:[%s4 + $0x30] sm:$0xff]
        %v615 = vld [vmem:[%s4 + $0x38] sm:$0xff]
        %617 = vset.pattern.permute.xlu0 0
        %618 = vperm.xlu0 %617, %v608
        %v619 = vpop.permute.xlu0 %618
        %622 = vset.pattern.permute.xlu0 0
        %623 = vperm.xlu0 %622, %v609
        %v624 = vpop.permute.xlu0 %623
        %627 = vset.pattern.permute.xlu0 0
        %628 = vperm.xlu0 %627, %v610
        %v629 = vpop.permute.xlu0 %628
        %632 = vset.pattern.permute.xlu0 0
        %633 = vperm.xlu0 %632, %v611
        %v634 = vpop.permute.xlu0 %633
        %637 = vset.pattern.permute.xlu0 0
        %638 = vperm.xlu0 %637, %v612
        %v639 = vpop.permute.xlu0 %638
        %642 = vset.pattern.permute.xlu0 0
        %643 = vperm.xlu0 %642, %v613
        %v644 = vpop.permute.xlu0 %643
        %647 = vset.pattern.permute.xlu0 0
        %648 = vperm.xlu0 %647, %v614
        %v649 = vpop.permute.xlu0 %648
        %652 = vset.pattern.permute.xlu0 0
        %653 = vperm.xlu0 %652, %v615
        %v654 = vpop.permute.xlu0 %653
        %vm656 = vcmask 523264
        %v658 = vsel %vm656, %v600, 0
        %v661 = vsel %vm656, %v601, 0
        %v664 = vsel %vm656, %v602, 0
        %v667 = vsel %vm656, %v603, 0
        %v670 = vsel %vm656, %v604, 0
        %v673 = vsel %vm656, %v605, 0
        %v676 = vsel %vm656, %v606, 0
        %v679 = vsel %vm656, %v607, 0
        %681 = vmatpush.msra.mxu0 0.0
        %682 = vmatpush.msra.mxu0 0.0
        %683 = vmatpush.msra.mxu0 0.0
        %684 = vmatpush.msra.mxu0 0.0
        %685 = vmatpush.msra.mxu0 0.0
        %686 = vmatpush.msra.mxu0 0.0
        %687 = vmatpush.msra.mxu0 0.0
        %688 = vmatpush.msra.mxu0 0.0
        %689 = vmatpush.msra.mxu0 %v596
        %690 = vmatpush.msra.mxu0 %v592
        %691 = vmatpush.msra.mxu0 %v588
        %692 = vmatpush.msra.mxu0 %v584
        %693 = vmatpush.msra.mxu0 %v580
        %694 = vmatpush.msra.mxu0 %v576
        %695 = vmatpush.msra.mxu0 %v572
        %696 = vmatpush.msra.mxu0 %v568
        %697 = vmatmul.f32.gmra.mxu0 %v658
        %v698 = vpop.f32.mrf.mxu0
        %v699 = vadd.f32 %v619, %v698
        %700 = vmatmul.f32.gmra.mxu0 %v661
        %v701 = vpop.f32.mrf.mxu0
        %v702 = vadd.f32 %v624, %v701
        %703 = vmatmul.f32.gmra.mxu0 %v664
        %v704 = vpop.f32.mrf.mxu0
        %v705 = vadd.f32 %v629, %v704
        %706 = vmatmul.f32.gmra.mxu0 %v667
        %v707 = vpop.f32.mrf.mxu0
        %v708 = vadd.f32 %v634, %v707
        %709 = vmatmul.f32.gmra.mxu0 %v670
        %v710 = vpop.f32.mrf.mxu0
        %v711 = vadd.f32 %v639, %v710
        %712 = vmatmul.f32.gmra.mxu0 %v673
        %v713 = vpop.f32.mrf.mxu0
        %v714 = vadd.f32 %v644, %v713
        %715 = vmatmul.f32.gmra.mxu0 %v676
        %v716 = vpop.f32.mrf.mxu0
        %v717 = vadd.f32 %v649, %v716
        %718 = vmatmul.f32.gmra.mxu0 %v679
        %v719 = vpop.f32.mrf.mxu0
        %v720 = vadd.f32 %v654, %v719
        %721 = vdwg.mxu0
        %722 = vmatpush.msra.mxu0 0.0
        %723 = vmatpush.msra.mxu0 0.0
        %724 = vmatpush.msra.mxu0 0.0
        %725 = vmatpush.msra.mxu0 0.0
        %726 = vmatpush.msra.mxu0 0.0
        %727 = vmatpush.msra.mxu0 0.0
        %728 = vmatpush.msra.mxu0 0.0
        %729 = vmatpush.msra.mxu0 0.0
        %730 = vmatpush.msra.mxu0 %v597
        %731 = vmatpush.msra.mxu0 %v593
        %732 = vmatpush.msra.mxu0 %v589
        %733 = vmatpush.msra.mxu0 %v585
        %734 = vmatpush.msra.mxu0 %v581
        %735 = vmatpush.msra.mxu0 %v577
        %736 = vmatpush.msra.mxu0 %v573
        %737 = vmatpush.msra.mxu0 %v569
        %738 = vmatmul.f32.gmra.mxu0 %v658
        %v739 = vpop.f32.mrf.mxu0
        %v740 = vadd.f32 %v619, %v739
        %741 = vmatmul.f32.gmra.mxu0 %v661
        %v742 = vpop.f32.mrf.mxu0
        %v743 = vadd.f32 %v624, %v742
        %744 = vmatmul.f32.gmra.mxu0 %v664
        %v745 = vpop.f32.mrf.mxu0
        %v746 = vadd.f32 %v629, %v745
        %747 = vmatmul.f32.gmra.mxu0 %v667
        %v748 = vpop.f32.mrf.mxu0
        %v749 = vadd.f32 %v634, %v748
        %750 = vmatmul.f32.gmra.mxu0 %v670
        %v751 = vpop.f32.mrf.mxu0
        %v752 = vadd.f32 %v639, %v751
        %753 = vmatmul.f32.gmra.mxu0 %v673
        %v754 = vpop.f32.mrf.mxu0
        %v755 = vadd.f32 %v644, %v754
        %756 = vmatmul.f32.gmra.mxu0 %v676
        %v757 = vpop.f32.mrf.mxu0
        %v758 = vadd.f32 %v649, %v757
        %759 = vmatmul.f32.gmra.mxu0 %v679
        %v760 = vpop.f32.mrf.mxu0
        %v761 = vadd.f32 %v654, %v760
        %762 = vdwg.mxu0
        %763 = vmatpush.msra.mxu0 0.0
        %764 = vmatpush.msra.mxu0 0.0
        %765 = vmatpush.msra.mxu0 0.0
        %766 = vmatpush.msra.mxu0 0.0
        %767 = vmatpush.msra.mxu0 0.0
        %768 = vmatpush.msra.mxu0 0.0
        %769 = vmatpush.msra.mxu0 0.0
        %770 = vmatpush.msra.mxu0 0.0
        %771 = vmatpush.msra.mxu0 %v598
        %772 = vmatpush.msra.mxu0 %v594
        %773 = vmatpush.msra.mxu0 %v590
        %774 = vmatpush.msra.mxu0 %v586
        %775 = vmatpush.msra.mxu0 %v582
        %776 = vmatpush.msra.mxu0 %v578
        %777 = vmatpush.msra.mxu0 %v574
        %778 = vmatpush.msra.mxu0 %v570
        %779 = vmatmul.f32.gmra.mxu0 %v658
        %v780 = vpop.f32.mrf.mxu0
        %v781 = vadd.f32 %v619, %v780
        %782 = vmatmul.f32.gmra.mxu0 %v661
        %v783 = vpop.f32.mrf.mxu0
        %v784 = vadd.f32 %v624, %v783
        %785 = vmatmul.f32.gmra.mxu0 %v664
        %v786 = vpop.f32.mrf.mxu0
        %v787 = vadd.f32 %v629, %v786
        %788 = vmatmul.f32.gmra.mxu0 %v667
        %v789 = vpop.f32.mrf.mxu0
        %v790 = vadd.f32 %v634, %v789
        %791 = vmatmul.f32.gmra.mxu0 %v670
        %v792 = vpop.f32.mrf.mxu0
        %v793 = vadd.f32 %v639, %v792
        %794 = vmatmul.f32.gmra.mxu0 %v673
        %v795 = vpop.f32.mrf.mxu0
        %v796 = vadd.f32 %v644, %v795
        %797 = vmatmul.f32.gmra.mxu0 %v676
        %v798 = vpop.f32.mrf.mxu0
        %v799 = vadd.f32 %v649, %v798
        %800 = vmatmul.f32.gmra.mxu0 %v679
        %v801 = vpop.f32.mrf.mxu0
        %v802 = vadd.f32 %v654, %v801
        %803 = vdwg.mxu0
        %804 = vmatpush.msra.mxu0 0.0
        %805 = vmatpush.msra.mxu0 0.0
        %806 = vmatpush.msra.mxu0 0.0
        %807 = vmatpush.msra.mxu0 0.0
        %808 = vmatpush.msra.mxu0 0.0
        %809 = vmatpush.msra.mxu0 0.0
        %810 = vmatpush.msra.mxu0 0.0
        %811 = vmatpush.msra.mxu0 0.0
        %812 = vmatpush.msra.mxu0 %v599
        %813 = vmatpush.msra.mxu0 %v595
        %814 = vmatpush.msra.mxu0 %v591
        %815 = vmatpush.msra.mxu0 %v587
        %816 = vmatpush.msra.mxu0 %v583
        %817 = vmatpush.msra.mxu0 %v579
        %818 = vmatpush.msra.mxu0 %v575
        %819 = vmatpush.msra.mxu0 %v571
        %820 = vmatmul.f32.gmra.mxu0 %v658
        %v821 = vpop.f32.mrf.mxu0
        %v822 = vadd.f32 %v619, %v821
        %823 = vmatmul.f32.gmra.mxu0 %v661
        %v824 = vpop.f32.mrf.mxu0
        %v825 = vadd.f32 %v624, %v824
        %826 = vmatmul.f32.gmra.mxu0 %v664
        %v827 = vpop.f32.mrf.mxu0
        %v828 = vadd.f32 %v629, %v827
        %829 = vmatmul.f32.gmra.mxu0 %v667
        %v830 = vpop.f32.mrf.mxu0
        %v831 = vadd.f32 %v634, %v830
        %832 = vmatmul.f32.gmra.mxu0 %v670
        %v833 = vpop.f32.mrf.mxu0
        %v834 = vadd.f32 %v639, %v833
        %835 = vmatmul.f32.gmra.mxu0 %v673
        %v836 = vpop.f32.mrf.mxu0
        %v837 = vadd.f32 %v644, %v836
        %838 = vmatmul.f32.gmra.mxu0 %v676
        %v839 = vpop.f32.mrf.mxu0
        %v840 = vadd.f32 %v649, %v839
        %841 = vmatmul.f32.gmra.mxu0 %v679
        %v842 = vpop.f32.mrf.mxu0
        %v843 = vadd.f32 %v654, %v842
        %844 = vdwg.mxu0
        %v845 = vmax.f32 %v699, 0.0
        %v846 = vmax.f32 %v740, 0.0
        %v847 = vmax.f32 %v781, 0.0
        %v848 = vmax.f32 %v822, 0.0
        %v849 = vmax.f32 %v702, 0.0
        %v850 = vmax.f32 %v743, 0.0
        %v851 = vmax.f32 %v784, 0.0
        %v852 = vmax.f32 %v825, 0.0
        %v853 = vmax.f32 %v705, 0.0
        %v854 = vmax.f32 %v746, 0.0
        %v855 = vmax.f32 %v787, 0.0
        %v856 = vmax.f32 %v828, 0.0
        %v857 = vmax.f32 %v708, 0.0
        %v858 = vmax.f32 %v749, 0.0
        %v859 = vmax.f32 %v790, 0.0
        %v860 = vmax.f32 %v831, 0.0
        %v861 = vmax.f32 %v711, 0.0
        %v862 = vmax.f32 %v752, 0.0
        %v863 = vmax.f32 %v793, 0.0
        %v864 = vmax.f32 %v834, 0.0
        %v865 = vmax.f32 %v714, 0.0
        %v866 = vmax.f32 %v755, 0.0
        %v867 = vmax.f32 %v796, 0.0
        %v868 = vmax.f32 %v837, 0.0
        %v869 = vmax.f32 %v717, 0.0
        %v870 = vmax.f32 %v758, 0.0
        %v871 = vmax.f32 %v799, 0.0
        %v872 = vmax.f32 %v840, 0.0
        %v873 = vmax.f32 %v720, 0.0
        %v874 = vmax.f32 %v761, 0.0
        %v875 = vmax.f32 %v802, 0.0
        %v876 = vmax.f32 %v843, 0.0
        %v877 = vld [vmem:[%s5] sm:$0xff]
        %v879 = vsel %vm656, %v877, 0
        %881 = vmatpush.msra.mxu0 0.0
        %882 = vmatpush.msra.mxu0 0.0
        %883 = vmatpush.msra.mxu0 0.0
        %884 = vmatpush.msra.mxu0 0.0
        %885 = vmatpush.msra.mxu0 0.0
        %886 = vmatpush.msra.mxu0 0.0
        %887 = vmatpush.msra.mxu0 0.0
        %888 = vmatpush.msra.mxu0 0.0
        %889 = vmatpush.msra.mxu0 %v873
        %890 = vmatpush.msra.mxu0 %v869
        %891 = vmatpush.msra.mxu0 %v865
        %892 = vmatpush.msra.mxu0 %v861
        %893 = vmatpush.msra.mxu0 %v857
        %894 = vmatpush.msra.mxu0 %v853
        %895 = vmatpush.msra.mxu0 %v849
        %896 = vmatpush.msra.mxu0 %v845
        %897 = vmatmul.f32.gmra.mxu0 %v879
        %v898 = vpop.f32.mrf.mxu0
        %v899 = vadd.f32 0.0, %v898
        %900 = vdwg.mxu0
        %901 = vmatpush.msra.mxu0 0.0
        %902 = vmatpush.msra.mxu0 0.0
        %903 = vmatpush.msra.mxu0 0.0
        %904 = vmatpush.msra.mxu0 0.0
        %905 = vmatpush.msra.mxu0 0.0
        %906 = vmatpush.msra.mxu0 0.0
        %907 = vmatpush.msra.mxu0 0.0
        %908 = vmatpush.msra.mxu0 0.0
        %909 = vmatpush.msra.mxu0 %v874
        %910 = vmatpush.msra.mxu0 %v870
        %911 = vmatpush.msra.mxu0 %v866
        %912 = vmatpush.msra.mxu0 %v862
        %913 = vmatpush.msra.mxu0 %v858
        %914 = vmatpush.msra.mxu0 %v854
        %915 = vmatpush.msra.mxu0 %v850
        %916 = vmatpush.msra.mxu0 %v846
        %917 = vmatmul.f32.gmra.mxu0 %v879
        %v918 = vpop.f32.mrf.mxu0
        %v919 = vadd.f32 0.0, %v918
        %920 = vdwg.mxu0
        %921 = vmatpush.msra.mxu0 0.0
        %922 = vmatpush.msra.mxu0 0.0
        %923 = vmatpush.msra.mxu0 0.0
        %924 = vmatpush.msra.mxu0 0.0
        %925 = vmatpush.msra.mxu0 0.0
        %926 = vmatpush.msra.mxu0 0.0
        %927 = vmatpush.msra.mxu0 0.0
        %928 = vmatpush.msra.mxu0 0.0
        %929 = vmatpush.msra.mxu0 %v875
        %930 = vmatpush.msra.mxu0 %v871
        %931 = vmatpush.msra.mxu0 %v867
        %932 = vmatpush.msra.mxu0 %v863
        %933 = vmatpush.msra.mxu0 %v859
        %934 = vmatpush.msra.mxu0 %v855
        %935 = vmatpush.msra.mxu0 %v851
        %936 = vmatpush.msra.mxu0 %v847
        %937 = vmatmul.f32.gmra.mxu0 %v879
        %v938 = vpop.f32.mrf.mxu0
        %v939 = vadd.f32 0.0, %v938
        %940 = vdwg.mxu0
        %941 = vmatpush.msra.mxu0 0.0
        %942 = vmatpush.msra.mxu0 0.0
        %943 = vmatpush.msra.mxu0 0.0
        %944 = vmatpush.msra.mxu0 0.0
        %945 = vmatpush.msra.mxu0 0.0
        %946 = vmatpush.msra.mxu0 0.0
        %947 = vmatpush.msra.mxu0 0.0
        %948 = vmatpush.msra.mxu0 0.0
        %949 = vmatpush.msra.mxu0 %v876
        %950 = vmatpush.msra.mxu0 %v872
        %951 = vmatpush.msra.mxu0 %v868
        %952 = vmatpush.msra.mxu0 %v864
        %953 = vmatpush.msra.mxu0 %v860
        %954 = vmatpush.msra.mxu0 %v856
        %955 = vmatpush.msra.mxu0 %v852
        %956 = vmatpush.msra.mxu0 %v848
        %957 = vmatmul.f32.gmra.mxu0 %v879
        %v958 = vpop.f32.mrf.mxu0
        %v959 = vadd.f32 0.0, %v958
        %960 = vdwg.mxu0
        %v961 = vld [vmem:[#allocation2] sm:$0x1]
        %963 = vset.pattern.permute.xlu0 0
        %964 = vperm.xlu0 %963, %v961
        %v965 = vpop.permute.xlu0 %964
        %v967 = vperm.slane %v965, 0
        %v968 = vadd.f32 %v899, %v967
        %v969 = vadd.f32 %v919, %v967
        %v970 = vadd.f32 %v939, %v967
        %v971 = vadd.f32 %v959, %v967
        %v976 = vrot.slane %v969, 7
        %v977 = vrot.slane %v970, 6
        %v978 = vrot.slane %v971, 5
        %vm979 = vcmask 1040384
        %v980 = vsel %vm979, %v968, %v976
        %vm981 = vcmask 1042434
        %v982 = vsel %vm981, %v977, %v978
        %vm983 = vcmask 1041408
        %v984 = vsel %vm983, %v980, %v982
        %v986 = vlaneseq
        %vm987 = vcmp.ge.s32.totalorder %v986, 0
        %vm988 = vcmp.lt.s32.totalorder %v986, 512
        %vm989 = vmand %vm987, %vm988
        %990 = vst.msk [vmem:[%s312] sm:$0xf] %vm989, %v984
        %s991 = sand.u32 %s183, 1
        %s992 = scalar_lea.sflag [#allocation5], %s991
        %s993 = sand.u32 %s183, 1
        %s994 = smul.addr %s993, 4
        %s995 = scalar_lea.vmem [#allocation4], %s994
        // Predicated region
        $region72: #{tpu_custom_call.1} parent=66 // pred_check
          %p996 = pneg %p193
        $region73: #{tpu_custom_call.1} parent=66 // pred_check_branch
          %998 = sbr.rel (%p996) target = $region75
        $region74: #{tpu_custom_call.1} parent=66 // pred_region
          %s999 = smul.u32 4, %s23
          %1001 = vsyncadd %s992, 0
          %s1002 = scalar_lea.hbm %s7, %s999
          %s1004 = sshll.u32 %s995, 4
          %s1005 = int_to_ptr.vmem [resolvable:$true] %s1004
          %s1006 = sshll.u32 %s1002, 4
          %s1007 = int_to_ptr.hbm [resolvable:$true] %s1006
          %1009 = dma.vmem_to_hbm [thread:$0]  %s1005, 64, %s1007, %s992
        $region75: #{tpu_custom_call.1} parent=66 // pred_fallthru
          _
      $region67: #{tpu_custom_call.1} parent=5 // pred_fallthru
        _
      %p1010 = scmp.le.s32.totalorder 2, %s18
      // Predicated region
      $region76: #{tpu_custom_call.1} parent=5 // pred_check
        %p1011 = pneg %p1010
      $region77: #{tpu_custom_call.1} parent=5 // pred_check_branch
        %1013 = sbr.rel (%p1011) target = $region79
      $region78: #{tpu_custom_call.1} parent=5 // pred_region
        %s1014 = ssub.s32 %s18, 2
        // Predicated region
        $region80: #{tpu_custom_call.1} parent=78 // pred_check
          %p1015 = pneg %p199
        $region81: #{tpu_custom_call.1} parent=78 // pred_check_branch
          %1017 = sbr.rel (%p1015) target = $region83
        $region82: #{tpu_custom_call.1} parent=78 // pred_region
          %s1018 = sand.u32 %s184, 1
          %s1019 = scalar_lea.sflag [#allocation5], %s1018
          %s1020 = sand.u32 %s184, 1
          %s1021 = smul.addr %s1020, 4
          %s1022 = scalar_lea.vmem [#allocation4], %s1021
          %1024 = dma.done %s1019, 64
        $region83: #{tpu_custom_call.1} parent=78 // pred_fallthru
          _
      $region79: #{tpu_custom_call.1} parent=5 // pred_fallthru
        _
    $region6: #{tpu_custom_call.1} parent=1 // loop_footer
      %s22 = sadd.s32 1, %s18
    $region7: #{tpu_custom_call.1} parent=1 // loop_footer_branch
      %17 = sbr.rel target = $region3
    $region8: #{tpu_custom_call.1} parent=1 // loop_exit
      _
    %1025 = vsyncpa [#allocation5], 1
    %s1026 = scalar_lea.sflag [#allocation5], 1
    %1027 = vsyncpa %s1026, 1

</llo_original>
